<compile_context>
chip_gen: v7x
topology: tpu7x:2x2x1
jax: 0.10.0
libtpu: 0.0.40
codegen_flags: <defaults>
</compile_context>

<pallas_src>
import functools

import numpy as np
import jax
import jax.numpy as jnp
from jax import lax
from jax.experimental import pallas as pl
from jax.experimental.pallas import tpu as pltpu

TILE_R = 2048            # max detections per grid step of the reduction kernel
MAXM = 128               # padded box count per NMS group (lane-dense IoU tiles)
GP = 8                   # NMS groups packed per grid step (fills the 8 sublanes)
NMS_IOU = 0.6
ZERO_COLS = (4, 7, 16)   # class_idx - 1 for the clean_class classes (5, 8, 17)

assert GP * 8 <= MAXM


def _pad_up(n, m):
    return ((n + m - 1) // m) * m


# ----------------------------------------------------------------------------
# Kernel 1: per-detection reductions over classes, all zero-mask variants.
# Input transposed on host to [C_pad, R_pad]: detections on lanes, classes on
# sublanes.  One pallas_call covers all detections via the row-tile grid and
# emits three lane-dense [8, R_pad] slabs (variant v zeroes column ZERO_COLS[b]
# whenever bit b of v is set):
#   arg_full[v] : argmax over all classes       (torch.argmax(row))
#   sf_max[v]   : max over classes 1..C-1       (torch.max(row[1:]))
#   sf_arg[v]   : argmax over classes 1..C-1 (full-column index)
# ----------------------------------------------------------------------------
def _multi_reduce_kernel(xt_ref, argfull_ref, sfmax_ref, sfarg_ref, *,
                         n_classes, zero_cols):
    xt = xt_ref[...]                                      # [C_pad, T]
    sub = lax.broadcasted_iota(jnp.int32, xt.shape, 0)    # class index / sublane
    neg = jnp.float32(-1e30)
    pad = sub >= n_classes
    sub_f = sub.astype(jnp.float32)
    big = jnp.float32(xt.shape[0])

    def _argmax(x):
        m = jnp.max(x, axis=0, keepdims=True)             # [1, T] lane-dense
        idx = jnp.min(jnp.where(x >= m, sub_f, big), axis=0, keepdims=True)
        return m, idx                                     # first-occurrence ties

    a_rows, m_rows, s_rows = [], [], []
    for v in range(8):
        xv = xt
        for b_, c_ in enumerate(zero_cols):
            if ((v >> b_) & 1) and c_ < n_classes:
                xv = jnp.where(sub == c_, jnp.float32(0.0), xv)  # literal zeroing
        xv = jnp.where(pad, neg, xv)
        _, a_full = _argmax(xv)                                   # all classes
        m_sf, a_sf = _argmax(jnp.where(sub == 0, neg, xv))        # skip background
        a_rows.append(a_full)
        m_rows.append(m_sf)
        s_rows.append(a_sf)
    argfull_ref[...] = jnp.concatenate(a_rows, axis=0).astype(jnp.int32)
    sfmax_ref[...] = jnp.concatenate(m_rows, axis=0)
    sfarg_ref[...] = jnp.concatenate(s_rows, axis=0).astype(jnp.int32)


@functools.lru_cache(maxsize=None)
def _build_reduce_call(c_pad, r_pad, tile_r, n_classes, zero_cols):
    n_tiles = r_pad // tile_r
    kernel = functools.partial(_multi_reduce_kernel, n_classes=n_classes,
                               zero_cols=zero_cols)
    return jax.jit(pl.pallas_call(
        kernel,
        out_shape=(jax.ShapeDtypeStruct((8, r_pad), jnp.int32),
                   jax.ShapeDtypeStruct((8, r_pad), jnp.float32),
                   jax.ShapeDtypeStruct((8, r_pad), jnp.int32)),
        grid=(n_tiles,),
        in_specs=[pl.BlockSpec((c_pad, tile_r), lambda i: (0, i))],
        out_specs=(pl.BlockSpec((8, tile_r), lambda i: (0, i)),
                   pl.BlockSpec((8, tile_r), lambda i: (0, i)),
                   pl.BlockSpec((8, tile_r), lambda i: (0, i))),
        compiler_params=pltpu.CompilerParams(
            dimension_semantics=("parallel",)),
    ))


def multi_mask_reduce(x_np, n_classes):
    """x_np: [R, C] float32 scores.  ONE Pallas dispatch returning, for each of
    the 8 zeroed-column variants: full-row argmax, max over columns 1.., and
    argmax over columns 1.. (full-column index)."""
    x_np = np.asarray(x_np, np.float32)
    r, c = x_np.shape
    if r == 0:
        z = np.zeros((8, 0))
        return z.astype(np.int32), z.astype(np.float32), z.astype(np.int32)
    c_pad = _pad_up(max(c, 1), 8)
    if r <= TILE_R:
        r_pad = _pad_up(r, 128)      # single grid step, full-array block
        tile = r_pad
    else:
        r_pad = _pad_up(r, TILE_R)   # big lane tiles amortize grid overhead
        tile = TILE_R
    xt = np.zeros((c_pad, r_pad), np.float32)
    xt[:c, :r] = x_np.T
    fn = _build_reduce_call(c_pad, r_pad, tile, c, ZERO_COLS)
    af, sm, sa = fn(jnp.asarray(xt))
    return (np.asarray(af)[:, :r].copy(),
            np.asarray(sm)[:, :r].copy(),
            np.asarray(sa)[:, :r].copy())


# ----------------------------------------------------------------------------
# Kernel 2: batched greedy NMS, GP groups per grid step.  Per-group true box
# counts arrive via scalar prefetch (SMEM).  Only input: lane-dense transposed
# boxes [G*8, MAXM] (rows 8g..8g+3 = x1,y1,x2,y2 of group g).  Column-form
# coordinates come from one square [128,128] transpose per step.  The IoU
# matrix is written once to VMEM scratch; the suppression loop is bounded by
# the true count and reads IoU row i with a dynamic sublane slice.
# ----------------------------------------------------------------------------
def _nms_kernel(counts_ref, boxest_ref, keep_ref, iou_ref, *,
                iou_thresh, gp, maxm):
    step = pl.program_id(0)
    bt_all = boxest_ref[...]                              # [gp*8, maxm]
    pad_rows = maxm - gp * 8
    sq = jnp.concatenate(
        [bt_all, jnp.zeros((pad_rows, maxm), jnp.float32)], axis=0)  # [M, M]
    tr = sq.T                                             # column 8g+k = coord k
    col = lax.broadcasted_iota(jnp.int32, (1, maxm), 1)   # lane index [1, M]

    keep_rows = []
    for g in range(gp):                                   # static unroll
        n = counts_ref[step * gp + g]                     # true box count
        base = 8 * g
        x1r = bt_all[base + 0:base + 1, :]                # [1, M]
        y1r = bt_all[base + 1:base + 2, :]
        x2r = bt_all[base + 2:base + 3, :]
        y2r = bt_all[base + 3:base + 4, :]
        x1c = tr[:, base + 0:base + 1]                    # [M, 1]
        y1c = tr[:, base + 1:base + 2]
        x2c = tr[:, base + 2:base + 3]
        y2c = tr[:, base + 3:base + 4]

        area_r = (x2r - x1r) * (y2r - y1r)                # [1, M]
        area_c = (x2c - x1c) * (y2c - y1c)                # [M, 1]
        iw = jnp.maximum(jnp.minimum(x2c, x2r) - jnp.maximum(x1c, x1r), 0.0)
        ih = jnp.maximum(jnp.minimum(y2c, y2r) - jnp.maximum(y1c, y1r), 0.0)
        inter = iw * ih                                   # [M, M]
        iou_ref[...] = inter / jnp.maximum(area_c + area_r - inter, 1e-10)

        keep0 = (col < n).astype(jnp.float32)             # [1, M]

        def body(i, keep):
            iou_i = iou_ref[pl.ds(i, 1), :]                          # [1, M]
            # keep[i] via one-hot lane reduce (single vreg).
            ki = jnp.sum(jnp.where(col == i, keep, 0.0), axis=1, keepdims=True)
            suppress = (iou_i > iou_thresh) & (col > i) & (ki > 0.5)
            return jnp.where(suppress, 0.0, keep)

        keep_rows.append(lax.fori_loop(0, n, body, keep0))  # bounded by count

    keep_ref[...] = jnp.concatenate(keep_rows, axis=0)    # one (8,128) store


@functools.lru_cache(maxsize=None)
def _build_nms_call(n_steps):
    g_total = n_steps * GP
    kernel = functools.partial(_nms_kernel, iou_thresh=NMS_IOU, gp=GP, maxm=MAXM)
    return jax.jit(pl.pallas_call(
        kernel,
        out_shape=jax.ShapeDtypeStruct((g_total, MAXM), jnp.float32),
        grid_spec=pltpu.PrefetchScalarGridSpec(
            num_scalar_prefetch=1,
            grid=(n_steps,),
            in_specs=[pl.BlockSpec((GP * 8, MAXM), lambda s, cnt: (s, 0))],
            out_specs=pl.BlockSpec((GP, MAXM), lambda s, cnt: (s, 0)),
            scratch_shapes=[pltpu.VMEM((MAXM, MAXM), jnp.float32)]),
        compiler_params=pltpu.CompilerParams(
            dimension_semantics=("parallel",)),
    ))


def batched_nms(groups):
    """groups: list of [m_i, 4] float32 boxes, each sorted by descending score.
    Returns a list of kept-index arrays (torchvision.ops.nms semantics per
    group), computed with ONE pallas_call packing GP groups per grid step."""
    n_groups = len(groups)
    if n_groups == 0:
        return []
    n_steps = _pad_up(n_groups, GP) // GP
    g_total = n_steps * GP
    boxes_t = np.zeros((g_total * 8, MAXM), np.float32)
    counts = np.zeros((g_total,), np.int32)
    for gi, gb in enumerate(groups):
        m = gb.shape[0]
        assert m <= MAXM, f"NMS group with {m} boxes exceeds MAXM={MAXM}"
        boxes_t[gi * 8:gi * 8 + 4, :m] = gb.T
        counts[gi] = m
    fn = _build_nms_call(n_steps)
    keep = np.asarray(fn(jnp.asarray(counts), jnp.asarray(boxes_t)))
    return [np.nonzero(keep[gi, :groups[gi].shape[0]] > 0.5)[0]
            for gi in range(n_groups)]


# ----------------------------------------------------------------------------
# Host glue reproducing ObjectClassifier / STTran (eval mode) semantics
# ----------------------------------------------------------------------------
class ObjectClassifierPallas:
    def __init__(self, mode='sgdet', obj_classes=None):
        self.classes = obj_classes
        self.mode = mode

    def forward(self, entry):
        boxes = np.asarray(entry['boxes'], np.float32)
        dist = np.asarray(entry['distribution'], np.float32)
        feats = np.asarray(entry['features'], np.float32)
        labels = np.asarray(entry['pred_labels'], np.int64)
        n_rows, n_cls = dist.shape
        b = int(boxes[-1, 0]) + 1

        # ---- ONE reduction dispatch covering every argmax/max used below ----
        arg_full, sf_max, sf_arg = multi_mask_reduce(dist, n_cls)

        # per-row bookkeeping: original source row + 3-bit zeroed-column mask
        src = np.arange(n_rows, dtype=np.int64)
        mask_id = np.zeros((n_rows,), np.int64)

        # ---- clean_class for classes 5, 8, 17 (host glue on kernel results) --
        for bit, class_idx in enumerate((5, 8, 17)):
            col = class_idx - 1
            nb, nd, nf, nl, ns, nm = [], [], [], [], [], []
            for i in range(b):
                fm = boxes[:, 0] == i
                sel = fm & (labels == class_idx)
                dup_dist = dist[sel].copy()
                dup_dist[:, col] = 0.0
                dup_mask = mask_id[sel] | (1 << bit)
                dup_lab = arg_full[dup_mask, src[sel]].astype(np.int64) + 1
                nd += [dist[fm], dup_dist]
                nb += [boxes[fm], boxes[sel]]
                nf += [feats[fm], feats[sel]]
                nl += [labels[fm], dup_lab]
                ns += [src[fm], src[sel]]
                nm += [mask_id[fm], dup_mask]
            boxes = np.concatenate(nb, axis=0)
            dist = np.concatenate(nd, axis=0)
            feats = np.concatenate(nf, axis=0)
            labels = np.concatenate(nl, axis=0)
            src = np.concatenate(ns, axis=0)
            mask_id = np.concatenate(nm, axis=0)

        # ---- per-frame / per-class grouping, then ONE batched-NMS dispatch ---
        row_arg = arg_full[mask_id, src]       # argmax of every stored row
        groups, meta = [], []
        for i in range(b):
            fidx = np.nonzero(boxes[:, 0] == i)[0]
            if fidx.size == 0:
                continue
            scores = dist[fidx]
            pred_boxes = boxes[fidx][:, 1:]
            ffeats = feats[fidx]
            fra = row_arg[fidx]
            fsrc = src[fidx]
            fmask = mask_id[fidx]
            for j in range(len(self.classes) - 1):
                inds = np.nonzero(fra == j)[0]
                if inds.size == 0:
                    continue
                order = np.argsort(-scores[inds, j], kind='stable')
                sel = inds[order]
                groups.append(pred_boxes[sel])
                meta.append((i, scores[sel], ffeats[sel], pred_boxes[sel],
                             fsrc[sel], fmask[sel]))

        keeps = batched_nms(groups)            # ONE pallas_call, GP groups/step

        final_boxes, final_dists, final_feats = [], [], []
        kept_src, kept_mask = [], []
        for (i, cls_dists, cls_feats, cls_boxes, s_, m_), keep in zip(meta, keeps):
            final_dists.append(cls_dists[keep])
            final_boxes.append(np.concatenate(
                [np.full((keep.shape[0], 1), float(i), np.float32),
                 cls_boxes[keep]], axis=1))
            final_feats.append(cls_feats[keep])
            kept_src.append(s_[keep])
            kept_mask.append(m_[keep])

        entry['boxes'] = np.concatenate(final_boxes, axis=0)
        entry['distribution'] = np.concatenate(final_dists, axis=0)
        entry['features'] = np.concatenate(final_feats, axis=0)
        # NOTE: reference prints the post-NMS box count; omitted so stdout is
        # exactly "KERNEL_OK" on success.

        # pred_scores, pred_labels = max(distribution[:, 1:], dim=1); labels += 2
        ks = np.concatenate(kept_src, axis=0)
        km = np.concatenate(kept_mask, axis=0)
        entry['pred_scores'] = sf_max[km, ks].astype(np.float32)
        entry['pred_labels'] = sf_arg[km, ks].astype(np.int64) + 1  # (idx-1)+2
        return entry


class STTranPallas:
    def __init__(self, mode='sgdet', attention_class_num=None,
                 spatial_class_num=None, contact_class_num=None,
                 obj_classes=None, rel_classes=None,
                 enc_layer_num=None, dec_layer_num=None):
        assert mode in ('sgdet', 'sgcls', 'predcls')
        self.obj_classes = obj_classes
        self.mode = mode
        self.object_classifier = ObjectClassifierPallas(mode=mode,
                                                        obj_classes=obj_classes)

    def forward(self, entry):
        return self.object_classifier.forward(entry)


# ----------------------------------------------------------------------------
if __name__ == "__main__":
    key = jax.random.PRNGKey(0)
    N, B, C, D = 12, 2, 19, 32
    obj_classes = ['__background__'] + [f'class_{k}' for k in range(1, 20)]  # len 20

    k1, k2, k3, k4 = jax.random.split(key, 4)
    dist = jax.nn.softmax(2.0 * jax.random.normal(k1, (N, C), jnp.float32), axis=-1)
    feats = jax.random.normal(k2, (N, D), jnp.float32)
    xy = jax.random.uniform(k3, (N, 2), jnp.float32, 0.0, 48.0)
    wh = jax.random.uniform(k4, (N, 2), jnp.float32, 4.0, 20.0)

    bidx = np.repeat(np.arange(B), N // B).astype(np.float32)[:, None]
    boxes = np.concatenate([bidx, np.asarray(xy),
                            np.asarray(xy) + np.asarray(wh)], axis=1).astype(np.float32)
    dist_np = np.asarray(dist, np.float32)
    feats_np = np.asarray(feats, np.float32)

    # initial pred_labels = argmax(distribution) + 1 (variant 0 of the kernel)
    arg_full0, _, _ = multi_mask_reduce(dist_np, C)
    entry = {
        'boxes': boxes,
        'distribution': dist_np,
        'features': feats_np,
        'pred_labels': arg_full0[0].astype(np.int64) + 1,
    }

    model = STTranPallas(mode='sgdet', obj_classes=obj_classes)
    out = model.forward(entry)

    # sanity: final reduction kernel vs NumPy reference of the torch semantics
    ref_scores = out['distribution'][:, 1:].max(axis=1)
    ref_labels = out['distribution'][:, 1:].argmax(axis=1) + 2
    assert out['boxes'].shape[1] == 5
    assert np.allclose(out['pred_scores'], ref_scores, atol=1e-6)
    assert np.array_equal(out['pred_labels'], ref_labels)

    jax.block_until_ready(jax.device_put(out['pred_scores']))
    print("KERNEL_OK")
</pallas_src>

<mosaic_0001>
module attributes {stable_mosaic.version = 11 : i64} {
  func.func @_multi_reduce_kernel(%arg0: i32, %arg1: memref<24x128xf32, #tpu.memory_space<vmem>>, %arg2: memref<8x128xi32, #tpu.memory_space<vmem>>, %arg3: memref<8x128xf32, #tpu.memory_space<vmem>>, %arg4: memref<8x128xi32, #tpu.memory_space<vmem>>) attributes {dimension_semantics = [#tpu.dimension_semantics<parallel>], iteration_bounds = array<i64: 1>, scalar_prefetch = 0 : i64, scratch_operands = 0 : i64, tpu.core_type = #tpu.core_type<tc>, window_params = [{transform_indices = @transform_0, window_bounds = array<i64: 24, 128>}, {transform_indices = @transform_1, window_bounds = array<i64: 8, 128>}, {transform_indices = @transform_2, window_bounds = array<i64: 8, 128>}, {transform_indices = @transform_3, window_bounds = array<i64: 8, 128>}]} {
    %c0 = arith.constant 0 : index
    %c0_0 = arith.constant 0 : index
    %0 = vector.load %arg1[%c0, %c0_0] : memref<24x128xf32, #tpu.memory_space<vmem>>, vector<24x128xf32>
    %1 = tpu.iota {dimensions = array<i32: 0>} : vector<24x128xi32>
    %c19_i32 = arith.constant 19 : i32
    %2 = vector.broadcast %c19_i32 : i32 to vector<24x128xi32>
    %3 = arith.cmpi sge, %1, %2 : vector<24x128xi32>
    %4 = arith.sitofp %1 : vector<24x128xi32> to vector<24x128xf32>
    %cst = arith.constant -1.000000e+30 : f32
    %5 = vector.broadcast %cst : f32 to vector<24x128xf32>
    %6 = arith.select %3, %5, %0 : vector<24x128xi1>, vector<24x128xf32>
    %cst_1 = arith.constant dense<0xFF800000> : vector<128xf32>
    %7 = vector.multi_reduction <maximumf>, %6, %cst_1 [0] : vector<24x128xf32> to vector<128xf32>
    %8 = vector.shape_cast %7 : vector<128xf32> to vector<1x128xf32>
    %9 = vector.broadcast %8 : vector<1x128xf32> to vector<24x128xf32>
    %10 = arith.cmpf oge, %6, %9 : vector<24x128xf32>
    %cst_2 = arith.constant 2.400000e+01 : f32
    %11 = vector.broadcast %cst_2 : f32 to vector<24x128xf32>
    %12 = arith.select %10, %4, %11 : vector<24x128xi1>, vector<24x128xf32>
    %cst_3 = arith.constant dense<0x7F800000> : vector<128xf32>
    %13 = vector.multi_reduction <minimumf>, %12, %cst_3 [0] : vector<24x128xf32> to vector<128xf32>
    %14 = vector.shape_cast %13 : vector<128xf32> to vector<1x128xf32>
    %c0_i32 = arith.constant 0 : i32
    %15 = vector.broadcast %c0_i32 : i32 to vector<24x128xi32>
    %16 = arith.cmpi eq, %1, %15 : vector<24x128xi32>
    %cst_4 = arith.constant -1.000000e+30 : f32
    %17 = vector.broadcast %cst_4 : f32 to vector<24x128xf32>
    %18 = arith.select %16, %17, %6 : vector<24x128xi1>, vector<24x128xf32>
    %cst_5 = arith.constant dense<0xFF800000> : vector<128xf32>
    %19 = vector.multi_reduction <maximumf>, %18, %cst_5 [0] : vector<24x128xf32> to vector<128xf32>
    %20 = vector.shape_cast %19 : vector<128xf32> to vector<1x128xf32>
    %21 = vector.broadcast %20 : vector<1x128xf32> to vector<24x128xf32>
    %22 = arith.cmpf oge, %18, %21 : vector<24x128xf32>
    %cst_6 = arith.constant 2.400000e+01 : f32
    %23 = vector.broadcast %cst_6 : f32 to vector<24x128xf32>
    %24 = arith.select %22, %4, %23 : vector<24x128xi1>, vector<24x128xf32>
    %cst_7 = arith.constant dense<0x7F800000> : vector<128xf32>
    %25 = vector.multi_reduction <minimumf>, %24, %cst_7 [0] : vector<24x128xf32> to vector<128xf32>
    %26 = vector.shape_cast %25 : vector<128xf32> to vector<1x128xf32>
    %c4_i32 = arith.constant 4 : i32
    %27 = vector.broadcast %c4_i32 : i32 to vector<24x128xi32>
    %28 = arith.cmpi eq, %1, %27 : vector<24x128xi32>
    %cst_8 = arith.constant 0.000000e+00 : f32
    %29 = vector.broadcast %cst_8 : f32 to vector<24x128xf32>
    %30 = arith.select %28, %29, %0 : vector<24x128xi1>, vector<24x128xf32>
    %cst_9 = arith.constant -1.000000e+30 : f32
    %31 = vector.broadcast %cst_9 : f32 to vector<24x128xf32>
    %32 = arith.select %3, %31, %30 : vector<24x128xi1>, vector<24x128xf32>
    %cst_10 = arith.constant dense<0xFF800000> : vector<128xf32>
    %33 = vector.multi_reduction <maximumf>, %32, %cst_10 [0] : vector<24x128xf32> to vector<128xf32>
    %34 = vector.shape_cast %33 : vector<128xf32> to vector<1x128xf32>
    %35 = vector.broadcast %34 : vector<1x128xf32> to vector<24x128xf32>
    %36 = arith.cmpf oge, %32, %35 : vector<24x128xf32>
    %cst_11 = arith.constant 2.400000e+01 : f32
    %37 = vector.broadcast %cst_11 : f32 to vector<24x128xf32>
    %38 = arith.select %36, %4, %37 : vector<24x128xi1>, vector<24x128xf32>
    %cst_12 = arith.constant dense<0x7F800000> : vector<128xf32>
    %39 = vector.multi_reduction <minimumf>, %38, %cst_12 [0] : vector<24x128xf32> to vector<128xf32>
    %40 = vector.shape_cast %39 : vector<128xf32> to vector<1x128xf32>
    %c0_i32_13 = arith.constant 0 : i32
    %41 = vector.broadcast %c0_i32_13 : i32 to vector<24x128xi32>
    %42 = arith.cmpi eq, %1, %41 : vector<24x128xi32>
    %cst_14 = arith.constant -1.000000e+30 : f32
    %43 = vector.broadcast %cst_14 : f32 to vector<24x128xf32>
    %44 = arith.select %42, %43, %32 : vector<24x128xi1>, vector<24x128xf32>
    %cst_15 = arith.constant dense<0xFF800000> : vector<128xf32>
    %45 = vector.multi_reduction <maximumf>, %44, %cst_15 [0] : vector<24x128xf32> to vector<128xf32>
    %46 = vector.shape_cast %45 : vector<128xf32> to vector<1x128xf32>
    %47 = vector.broadcast %46 : vector<1x128xf32> to vector<24x128xf32>
    %48 = arith.cmpf oge, %44, %47 : vector<24x128xf32>
    %cst_16 = arith.constant 2.400000e+01 : f32
    %49 = vector.broadcast %cst_16 : f32 to vector<24x128xf32>
    %50 = arith.select %48, %4, %49 : vector<24x128xi1>, vector<24x128xf32>
    %cst_17 = arith.constant dense<0x7F800000> : vector<128xf32>
    %51 = vector.multi_reduction <minimumf>, %50, %cst_17 [0] : vector<24x128xf32> to vector<128xf32>
    %52 = vector.shape_cast %51 : vector<128xf32> to vector<1x128xf32>
    %c7_i32 = arith.constant 7 : i32
    %53 = vector.broadcast %c7_i32 : i32 to vector<24x128xi32>
    %54 = arith.cmpi eq, %1, %53 : vector<24x128xi32>
    %cst_18 = arith.constant 0.000000e+00 : f32
    %55 = vector.broadcast %cst_18 : f32 to vector<24x128xf32>
    %56 = arith.select %54, %55, %0 : vector<24x128xi1>, vector<24x128xf32>
    %cst_19 = arith.constant -1.000000e+30 : f32
    %57 = vector.broadcast %cst_19 : f32 to vector<24x128xf32>
    %58 = arith.select %3, %57, %56 : vector<24x128xi1>, vector<24x128xf32>
    %cst_20 = arith.constant dense<0xFF800000> : vector<128xf32>
    %59 = vector.multi_reduction <maximumf>, %58, %cst_20 [0] : vector<24x128xf32> to vector<128xf32>
    %60 = vector.shape_cast %59 : vector<128xf32> to vector<1x128xf32>
    %61 = vector.broadcast %60 : vector<1x128xf32> to vector<24x128xf32>
    %62 = arith.cmpf oge, %58, %61 : vector<24x128xf32>
    %cst_21 = arith.constant 2.400000e+01 : f32
    %63 = vector.broadcast %cst_21 : f32 to vector<24x128xf32>
    %64 = arith.select %62, %4, %63 : vector<24x128xi1>, vector<24x128xf32>
    %cst_22 = arith.constant dense<0x7F800000> : vector<128xf32>
    %65 = vector.multi_reduction <minimumf>, %64, %cst_22 [0] : vector<24x128xf32> to vector<128xf32>
    %66 = vector.shape_cast %65 : vector<128xf32> to vector<1x128xf32>
    %c0_i32_23 = arith.constant 0 : i32
    %67 = vector.broadcast %c0_i32_23 : i32 to vector<24x128xi32>
    %68 = arith.cmpi eq, %1, %67 : vector<24x128xi32>
    %cst_24 = arith.constant -1.000000e+30 : f32
    %69 = vector.broadcast %cst_24 : f32 to vector<24x128xf32>
    %70 = arith.select %68, %69, %58 : vector<24x128xi1>, vector<24x128xf32>
    %cst_25 = arith.constant dense<0xFF800000> : vector<128xf32>
    %71 = vector.multi_reduction <maximumf>, %70, %cst_25 [0] : vector<24x128xf32> to vector<128xf32>
    %72 = vector.shape_cast %71 : vector<128xf32> to vector<1x128xf32>
    %73 = vector.broadcast %72 : vector<1x128xf32> to vector<24x128xf32>
    %74 = arith.cmpf oge, %70, %73 : vector<24x128xf32>
    %cst_26 = arith.constant 2.400000e+01 : f32
    %75 = vector.broadcast %cst_26 : f32 to vector<24x128xf32>
    %76 = arith.select %74, %4, %75 : vector<24x128xi1>, vector<24x128xf32>
    %cst_27 = arith.constant dense<0x7F800000> : vector<128xf32>
    %77 = vector.multi_reduction <minimumf>, %76, %cst_27 [0] : vector<24x128xf32> to vector<128xf32>
    %78 = vector.shape_cast %77 : vector<128xf32> to vector<1x128xf32>
    %c4_i32_28 = arith.constant 4 : i32
    %79 = vector.broadcast %c4_i32_28 : i32 to vector<24x128xi32>
    %80 = arith.cmpi eq, %1, %79 : vector<24x128xi32>
    %cst_29 = arith.constant 0.000000e+00 : f32
    %81 = vector.broadcast %cst_29 : f32 to vector<24x128xf32>
    %82 = arith.select %80, %81, %0 : vector<24x128xi1>, vector<24x128xf32>
    %c7_i32_30 = arith.constant 7 : i32
    %83 = vector.broadcast %c7_i32_30 : i32 to vector<24x128xi32>
    %84 = arith.cmpi eq, %1, %83 : vector<24x128xi32>
    %cst_31 = arith.constant 0.000000e+00 : f32
    %85 = vector.broadcast %cst_31 : f32 to vector<24x128xf32>
    %86 = arith.select %84, %85, %82 : vector<24x128xi1>, vector<24x128xf32>
    %cst_32 = arith.constant -1.000000e+30 : f32
    %87 = vector.broadcast %cst_32 : f32 to vector<24x128xf32>
    %88 = arith.select %3, %87, %86 : vector<24x128xi1>, vector<24x128xf32>
    %cst_33 = arith.constant dense<0xFF800000> : vector<128xf32>
    %89 = vector.multi_reduction <maximumf>, %88, %cst_33 [0] : vector<24x128xf32> to vector<128xf32>
    %90 = vector.shape_cast %89 : vector<128xf32> to vector<1x128xf32>
    %91 = vector.broadcast %90 : vector<1x128xf32> to vector<24x128xf32>
    %92 = arith.cmpf oge, %88, %91 : vector<24x128xf32>
    %cst_34 = arith.constant 2.400000e+01 : f32
    %93 = vector.broadcast %cst_34 : f32 to vector<24x128xf32>
    %94 = arith.select %92, %4, %93 : vector<24x128xi1>, vector<24x128xf32>
    %cst_35 = arith.constant dense<0x7F800000> : vector<128xf32>
    %95 = vector.multi_reduction <minimumf>, %94, %cst_35 [0] : vector<24x128xf32> to vector<128xf32>
    %96 = vector.shape_cast %95 : vector<128xf32> to vector<1x128xf32>
    %c0_i32_36 = arith.constant 0 : i32
    %97 = vector.broadcast %c0_i32_36 : i32 to vector<24x128xi32>
    %98 = arith.cmpi eq, %1, %97 : vector<24x128xi32>
    %cst_37 = arith.constant -1.000000e+30 : f32
    %99 = vector.broadcast %cst_37 : f32 to vector<24x128xf32>
    %100 = arith.select %98, %99, %88 : vector<24x128xi1>, vector<24x128xf32>
    %cst_38 = arith.constant dense<0xFF800000> : vector<128xf32>
    %101 = vector.multi_reduction <maximumf>, %100, %cst_38 [0] : vector<24x128xf32> to vector<128xf32>
    %102 = vector.shape_cast %101 : vector<128xf32> to vector<1x128xf32>
    %103 = vector.broadcast %102 : vector<1x128xf32> to vector<24x128xf32>
    %104 = arith.cmpf oge, %100, %103 : vector<24x128xf32>
    %cst_39 = arith.constant 2.400000e+01 : f32
    %105 = vector.broadcast %cst_39 : f32 to vector<24x128xf32>
    %106 = arith.select %104, %4, %105 : vector<24x128xi1>, vector<24x128xf32>
    %cst_40 = arith.constant dense<0x7F800000> : vector<128xf32>
    %107 = vector.multi_reduction <minimumf>, %106, %cst_40 [0] : vector<24x128xf32> to vector<128xf32>
    %108 = vector.shape_cast %107 : vector<128xf32> to vector<1x128xf32>
    %c16_i32 = arith.constant 16 : i32
    %109 = vector.broadcast %c16_i32 : i32 to vector<24x128xi32>
    %110 = arith.cmpi eq, %1, %109 : vector<24x128xi32>
    %cst_41 = arith.constant 0.000000e+00 : f32
    %111 = vector.broadcast %cst_41 : f32 to vector<24x128xf32>
    %112 = arith.select %110, %111, %0 : vector<24x128xi1>, vector<24x128xf32>
    %cst_42 = arith.constant -1.000000e+30 : f32
    %113 = vector.broadcast %cst_42 : f32 to vector<24x128xf32>
    %114 = arith.select %3, %113, %112 : vector<24x128xi1>, vector<24x128xf32>
    %cst_43 = arith.constant dense<0xFF800000> : vector<128xf32>
    %115 = vector.multi_reduction <maximumf>, %114, %cst_43 [0] : vector<24x128xf32> to vector<128xf32>
    %116 = vector.shape_cast %115 : vector<128xf32> to vector<1x128xf32>
    %117 = vector.broadcast %116 : vector<1x128xf32> to vector<24x128xf32>
    %118 = arith.cmpf oge, %114, %117 : vector<24x128xf32>
    %cst_44 = arith.constant 2.400000e+01 : f32
    %119 = vector.broadcast %cst_44 : f32 to vector<24x128xf32>
    %120 = arith.select %118, %4, %119 : vector<24x128xi1>, vector<24x128xf32>
    %cst_45 = arith.constant dense<0x7F800000> : vector<128xf32>
    %121 = vector.multi_reduction <minimumf>, %120, %cst_45 [0] : vector<24x128xf32> to vector<128xf32>
    %122 = vector.shape_cast %121 : vector<128xf32> to vector<1x128xf32>
    %c0_i32_46 = arith.constant 0 : i32
    %123 = vector.broadcast %c0_i32_46 : i32 to vector<24x128xi32>
    %124 = arith.cmpi eq, %1, %123 : vector<24x128xi32>
    %cst_47 = arith.constant -1.000000e+30 : f32
    %125 = vector.broadcast %cst_47 : f32 to vector<24x128xf32>
    %126 = arith.select %124, %125, %114 : vector<24x128xi1>, vector<24x128xf32>
    %cst_48 = arith.constant dense<0xFF800000> : vector<128xf32>
    %127 = vector.multi_reduction <maximumf>, %126, %cst_48 [0] : vector<24x128xf32> to vector<128xf32>
    %128 = vector.shape_cast %127 : vector<128xf32> to vector<1x128xf32>
    %129 = vector.broadcast %128 : vector<1x128xf32> to vector<24x128xf32>
    %130 = arith.cmpf oge, %126, %129 : vector<24x128xf32>
    %cst_49 = arith.constant 2.400000e+01 : f32
    %131 = vector.broadcast %cst_49 : f32 to vector<24x128xf32>
    %132 = arith.select %130, %4, %131 : vector<24x128xi1>, vector<24x128xf32>
    %cst_50 = arith.constant dense<0x7F800000> : vector<128xf32>
    %133 = vector.multi_reduction <minimumf>, %132, %cst_50 [0] : vector<24x128xf32> to vector<128xf32>
    %134 = vector.shape_cast %133 : vector<128xf32> to vector<1x128xf32>
    %c4_i32_51 = arith.constant 4 : i32
    %135 = vector.broadcast %c4_i32_51 : i32 to vector<24x128xi32>
    %136 = arith.cmpi eq, %1, %135 : vector<24x128xi32>
    %cst_52 = arith.constant 0.000000e+00 : f32
    %137 = vector.broadcast %cst_52 : f32 to vector<24x128xf32>
    %138 = arith.select %136, %137, %0 : vector<24x128xi1>, vector<24x128xf32>
    %c16_i32_53 = arith.constant 16 : i32
    %139 = vector.broadcast %c16_i32_53 : i32 to vector<24x128xi32>
    %140 = arith.cmpi eq, %1, %139 : vector<24x128xi32>
    %cst_54 = arith.constant 0.000000e+00 : f32
    %141 = vector.broadcast %cst_54 : f32 to vector<24x128xf32>
    %142 = arith.select %140, %141, %138 : vector<24x128xi1>, vector<24x128xf32>
    %cst_55 = arith.constant -1.000000e+30 : f32
    %143 = vector.broadcast %cst_55 : f32 to vector<24x128xf32>
    %144 = arith.select %3, %143, %142 : vector<24x128xi1>, vector<24x128xf32>
    %cst_56 = arith.constant dense<0xFF800000> : vector<128xf32>
    %145 = vector.multi_reduction <maximumf>, %144, %cst_56 [0] : vector<24x128xf32> to vector<128xf32>
    %146 = vector.shape_cast %145 : vector<128xf32> to vector<1x128xf32>
    %147 = vector.broadcast %146 : vector<1x128xf32> to vector<24x128xf32>
    %148 = arith.cmpf oge, %144, %147 : vector<24x128xf32>
    %cst_57 = arith.constant 2.400000e+01 : f32
    %149 = vector.broadcast %cst_57 : f32 to vector<24x128xf32>
    %150 = arith.select %148, %4, %149 : vector<24x128xi1>, vector<24x128xf32>
    %cst_58 = arith.constant dense<0x7F800000> : vector<128xf32>
    %151 = vector.multi_reduction <minimumf>, %150, %cst_58 [0] : vector<24x128xf32> to vector<128xf32>
    %152 = vector.shape_cast %151 : vector<128xf32> to vector<1x128xf32>
    %c0_i32_59 = arith.constant 0 : i32
    %153 = vector.broadcast %c0_i32_59 : i32 to vector<24x128xi32>
    %154 = arith.cmpi eq, %1, %153 : vector<24x128xi32>
    %cst_60 = arith.constant -1.000000e+30 : f32
    %155 = vector.broadcast %cst_60 : f32 to vector<24x128xf32>
    %156 = arith.select %154, %155, %144 : vector<24x128xi1>, vector<24x128xf32>
    %cst_61 = arith.constant dense<0xFF800000> : vector<128xf32>
    %157 = vector.multi_reduction <maximumf>, %156, %cst_61 [0] : vector<24x128xf32> to vector<128xf32>
    %158 = vector.shape_cast %157 : vector<128xf32> to vector<1x128xf32>
    %159 = vector.broadcast %158 : vector<1x128xf32> to vector<24x128xf32>
    %160 = arith.cmpf oge, %156, %159 : vector<24x128xf32>
    %cst_62 = arith.constant 2.400000e+01 : f32
    %161 = vector.broadcast %cst_62 : f32 to vector<24x128xf32>
    %162 = arith.select %160, %4, %161 : vector<24x128xi1>, vector<24x128xf32>
    %cst_63 = arith.constant dense<0x7F800000> : vector<128xf32>
    %163 = vector.multi_reduction <minimumf>, %162, %cst_63 [0] : vector<24x128xf32> to vector<128xf32>
    %164 = vector.shape_cast %163 : vector<128xf32> to vector<1x128xf32>
    %c7_i32_64 = arith.constant 7 : i32
    %165 = vector.broadcast %c7_i32_64 : i32 to vector<24x128xi32>
    %166 = arith.cmpi eq, %1, %165 : vector<24x128xi32>
    %cst_65 = arith.constant 0.000000e+00 : f32
    %167 = vector.broadcast %cst_65 : f32 to vector<24x128xf32>
    %168 = arith.select %166, %167, %0 : vector<24x128xi1>, vector<24x128xf32>
    %c16_i32_66 = arith.constant 16 : i32
    %169 = vector.broadcast %c16_i32_66 : i32 to vector<24x128xi32>
    %170 = arith.cmpi eq, %1, %169 : vector<24x128xi32>
    %cst_67 = arith.constant 0.000000e+00 : f32
    %171 = vector.broadcast %cst_67 : f32 to vector<24x128xf32>
    %172 = arith.select %170, %171, %168 : vector<24x128xi1>, vector<24x128xf32>
    %cst_68 = arith.constant -1.000000e+30 : f32
    %173 = vector.broadcast %cst_68 : f32 to vector<24x128xf32>
    %174 = arith.select %3, %173, %172 : vector<24x128xi1>, vector<24x128xf32>
    %cst_69 = arith.constant dense<0xFF800000> : vector<128xf32>
    %175 = vector.multi_reduction <maximumf>, %174, %cst_69 [0] : vector<24x128xf32> to vector<128xf32>
    %176 = vector.shape_cast %175 : vector<128xf32> to vector<1x128xf32>
    %177 = vector.broadcast %176 : vector<1x128xf32> to vector<24x128xf32>
    %178 = arith.cmpf oge, %174, %177 : vector<24x128xf32>
    %cst_70 = arith.constant 2.400000e+01 : f32
    %179 = vector.broadcast %cst_70 : f32 to vector<24x128xf32>
    %180 = arith.select %178, %4, %179 : vector<24x128xi1>, vector<24x128xf32>
    %cst_71 = arith.constant dense<0x7F800000> : vector<128xf32>
    %181 = vector.multi_reduction <minimumf>, %180, %cst_71 [0] : vector<24x128xf32> to vector<128xf32>
    %182 = vector.shape_cast %181 : vector<128xf32> to vector<1x128xf32>
    %c0_i32_72 = arith.constant 0 : i32
    %183 = vector.broadcast %c0_i32_72 : i32 to vector<24x128xi32>
    %184 = arith.cmpi eq, %1, %183 : vector<24x128xi32>
    %cst_73 = arith.constant -1.000000e+30 : f32
    %185 = vector.broadcast %cst_73 : f32 to vector<24x128xf32>
    %186 = arith.select %184, %185, %174 : vector<24x128xi1>, vector<24x128xf32>
    %cst_74 = arith.constant dense<0xFF800000> : vector<128xf32>
    %187 = vector.multi_reduction <maximumf>, %186, %cst_74 [0] : vector<24x128xf32> to vector<128xf32>
    %188 = vector.shape_cast %187 : vector<128xf32> to vector<1x128xf32>
    %189 = vector.broadcast %188 : vector<1x128xf32> to vector<24x128xf32>
    %190 = arith.cmpf oge, %186, %189 : vector<24x128xf32>
    %cst_75 = arith.constant 2.400000e+01 : f32
    %191 = vector.broadcast %cst_75 : f32 to vector<24x128xf32>
    %192 = arith.select %190, %4, %191 : vector<24x128xi1>, vector<24x128xf32>
    %cst_76 = arith.constant dense<0x7F800000> : vector<128xf32>
    %193 = vector.multi_reduction <minimumf>, %192, %cst_76 [0] : vector<24x128xf32> to vector<128xf32>
    %194 = vector.shape_cast %193 : vector<128xf32> to vector<1x128xf32>
    %c4_i32_77 = arith.constant 4 : i32
    %195 = vector.broadcast %c4_i32_77 : i32 to vector<24x128xi32>
    %196 = arith.cmpi eq, %1, %195 : vector<24x128xi32>
    %cst_78 = arith.constant 0.000000e+00 : f32
    %197 = vector.broadcast %cst_78 : f32 to vector<24x128xf32>
    %198 = arith.select %196, %197, %0 : vector<24x128xi1>, vector<24x128xf32>
    %c7_i32_79 = arith.constant 7 : i32
    %199 = vector.broadcast %c7_i32_79 : i32 to vector<24x128xi32>
    %200 = arith.cmpi eq, %1, %199 : vector<24x128xi32>
    %cst_80 = arith.constant 0.000000e+00 : f32
    %201 = vector.broadcast %cst_80 : f32 to vector<24x128xf32>
    %202 = arith.select %200, %201, %198 : vector<24x128xi1>, vector<24x128xf32>
    %c16_i32_81 = arith.constant 16 : i32
    %203 = vector.broadcast %c16_i32_81 : i32 to vector<24x128xi32>
    %204 = arith.cmpi eq, %1, %203 : vector<24x128xi32>
    %cst_82 = arith.constant 0.000000e+00 : f32
    %205 = vector.broadcast %cst_82 : f32 to vector<24x128xf32>
    %206 = arith.select %204, %205, %202 : vector<24x128xi1>, vector<24x128xf32>
    %cst_83 = arith.constant -1.000000e+30 : f32
    %207 = vector.broadcast %cst_83 : f32 to vector<24x128xf32>
    %208 = arith.select %3, %207, %206 : vector<24x128xi1>, vector<24x128xf32>
    %cst_84 = arith.constant dense<0xFF800000> : vector<128xf32>
    %209 = vector.multi_reduction <maximumf>, %208, %cst_84 [0] : vector<24x128xf32> to vector<128xf32>
    %210 = vector.shape_cast %209 : vector<128xf32> to vector<1x128xf32>
    %211 = vector.broadcast %210 : vector<1x128xf32> to vector<24x128xf32>
    %212 = arith.cmpf oge, %208, %211 : vector<24x128xf32>
    %cst_85 = arith.constant 2.400000e+01 : f32
    %213 = vector.broadcast %cst_85 : f32 to vector<24x128xf32>
    %214 = arith.select %212, %4, %213 : vector<24x128xi1>, vector<24x128xf32>
    %cst_86 = arith.constant dense<0x7F800000> : vector<128xf32>
    %215 = vector.multi_reduction <minimumf>, %214, %cst_86 [0] : vector<24x128xf32> to vector<128xf32>
    %216 = vector.shape_cast %215 : vector<128xf32> to vector<1x128xf32>
    %c0_i32_87 = arith.constant 0 : i32
    %217 = vector.broadcast %c0_i32_87 : i32 to vector<24x128xi32>
    %218 = arith.cmpi eq, %1, %217 : vector<24x128xi32>
    %cst_88 = arith.constant -1.000000e+30 : f32
    %219 = vector.broadcast %cst_88 : f32 to vector<24x128xf32>
    %220 = arith.select %218, %219, %208 : vector<24x128xi1>, vector<24x128xf32>
    %cst_89 = arith.constant dense<0xFF800000> : vector<128xf32>
    %221 = vector.multi_reduction <maximumf>, %220, %cst_89 [0] : vector<24x128xf32> to vector<128xf32>
    %222 = vector.shape_cast %221 : vector<128xf32> to vector<1x128xf32>
    %223 = vector.broadcast %222 : vector<1x128xf32> to vector<24x128xf32>
    %224 = arith.cmpf oge, %220, %223 : vector<24x128xf32>
    %cst_90 = arith.constant 2.400000e+01 : f32
    %225 = vector.broadcast %cst_90 : f32 to vector<24x128xf32>
    %226 = arith.select %224, %4, %225 : vector<24x128xi1>, vector<24x128xf32>
    %cst_91 = arith.constant dense<0x7F800000> : vector<128xf32>
    %227 = vector.multi_reduction <minimumf>, %226, %cst_91 [0] : vector<24x128xf32> to vector<128xf32>
    %228 = vector.shape_cast %227 : vector<128xf32> to vector<1x128xf32>
    %229 = tpu.concatenate %14, %40, %66, %96, %122, %152, %182, %216 in 0 : vector<1x128xf32>, vector<1x128xf32>, vector<1x128xf32>, vector<1x128xf32>, vector<1x128xf32>, vector<1x128xf32>, vector<1x128xf32>, vector<1x128xf32> -> vector<8x128xf32>
    %230 = arith.fptosi %229 : vector<8x128xf32> to vector<8x128xi32>
    %c0_92 = arith.constant 0 : index
    %c0_93 = arith.constant 0 : index
    %231 = vector.load %arg2[%c0_92, %c0_93] : memref<8x128xi32, #tpu.memory_space<vmem>>, vector<8x128xi32>
    tpu.vector_store %arg2[%c0_92, %c0_93], %230 {strides = array<i32>} : memref<8x128xi32, #tpu.memory_space<vmem>>, vector<8x128xi32>,
    %232 = tpu.concatenate %20, %46, %72, %102, %128, %158, %188, %222 in 0 : vector<1x128xf32>, vector<1x128xf32>, vector<1x128xf32>, vector<1x128xf32>, vector<1x128xf32>, vector<1x128xf32>, vector<1x128xf32>, vector<1x128xf32> -> vector<8x128xf32>
    %c0_94 = arith.constant 0 : index
    %c0_95 = arith.constant 0 : index
    %233 = vector.load %arg3[%c0_94, %c0_95] : memref<8x128xf32, #tpu.memory_space<vmem>>, vector<8x128xf32>
    tpu.vector_store %arg3[%c0_94, %c0_95], %232 {strides = array<i32>} : memref<8x128xf32, #tpu.memory_space<vmem>>, vector<8x128xf32>,
    %234 = tpu.concatenate %26, %52, %78, %108, %134, %164, %194, %228 in 0 : vector<1x128xf32>, vector<1x128xf32>, vector<1x128xf32>, vector<1x128xf32>, vector<1x128xf32>, vector<1x128xf32>, vector<1x128xf32>, vector<1x128xf32> -> vector<8x128xf32>
    %235 = arith.fptosi %234 : vector<8x128xf32> to vector<8x128xi32>
    %c0_96 = arith.constant 0 : index
    %c0_97 = arith.constant 0 : index
    %236 = vector.load %arg4[%c0_96, %c0_97] : memref<8x128xi32, #tpu.memory_space<vmem>>, vector<8x128xi32>
    tpu.vector_store %arg4[%c0_96, %c0_97], %235 {strides = array<i32>} : memref<8x128xi32, #tpu.memory_space<vmem>>, vector<8x128xi32>,
    return
  }
  func.func @transform_0(%arg0: i32) -> (i32, i32) {
    %c0_i32 = arith.constant 0 : i32
    %c0_i32_0 = arith.constant 0 : i32
    return %c0_i32, %arg0 : i32, i32
  }
  func.func @transform_1(%arg0: i32) -> (i32, i32) {
    %c0_i32 = arith.constant 0 : i32
    %c0_i32_0 = arith.constant 0 : i32
    return %c0_i32, %arg0 : i32, i32
  }
  func.func @transform_2(%arg0: i32) -> (i32, i32) {
    %c0_i32 = arith.constant 0 : i32
    %c0_i32_0 = arith.constant 0 : i32
    return %c0_i32, %arg0 : i32, i32
  }
  func.func @transform_3(%arg0: i32) -> (i32, i32) {
    %c0_i32 = arith.constant 0 : i32
    %c0_i32_0 = arith.constant 0 : i32
    return %c0_i32, %arg0 : i32, i32
  }
}

</mosaic_0001>

<llo_original>
// kernel: tpu_custom_call.1
$region0: #{tpu_custom_call.1}
  #allocation0 [shape = 'u32[]', space=smem, size = 0x4, offset = 0x4, fixed_abs, tag = 'smem constant byte address 0x4 - core index']
  #allocation1 [shape = 'u32[144,128]{1,0:T(1,128)}', space=vmem, size = 0x12000, scoped, tag = 'internal scratch']
  %s0 = inlined_call_operand.hbm [shape: f32[24,128], index: 0, kind: input, shape index: {}]
  %s1 = inlined_call_operand.hbm [shape: s32[8,128], index: 1, kind: output, shape index: {0}]
  %s2 = inlined_call_operand.hbm [shape: f32[8,128], index: 2, kind: output, shape index: {1}]
  %s3 = inlined_call_operand.hbm [shape: s32[8,128], index: 3, kind: output, shape index: {2}]
  %4 = xla_tuple %s1, %s2, %s3
  %s5 = sld [smem:[#allocation0]]
  $region34: #{tpu_custom_call.1} parent=0
    _
  %s7 = ssub.s32 1, %s5
  %s8 = scalar_select 0, %s7, %s5
  $region1: #{tpu_custom_call.1} parent=0
    #allocation2 [shape = 'u8[12288]{0}', space=vmem, size = 0x3000, scoped, tag = 'input window, operand 0, single buffered']
    #allocation3 [shape = 's32[1]{0}', space=sflag, size = 0x4, scoped, tag = 'scoped memory for tpu_custom_call.1']
    #allocation4 [shape = 's32[1]{0}', space=sflag, size = 0x4, scoped, tag = 'scoped memory for tpu_custom_call.1']
    #allocation5 [shape = 'u8[4096]{0}', space=vmem, size = 0x1000, scoped, tag = 'output window, operand 0, single buffered']
    #allocation6 [shape = 'u8[4096]{0}', space=vmem, size = 0x1000, scoped, tag = 'output window, operand 1, single buffered']
    #allocation7 [shape = 's32[1]{0}', space=sflag, size = 0x4, scoped, tag = 'scoped memory for tpu_custom_call.1']
    #allocation8 [shape = 'u8[4096]{0}', space=vmem, size = 0x1000, scoped, tag = 'output window, operand 2, single buffered']
    %9 = vsyncpa [#allocation3], 0
    %10 = vsyncpa [#allocation4], 0
    %11 = vsyncpa [#allocation7], 0
    // Predicated region
    $region2: #{tpu_custom_call.1} parent=1 // pred_check
      _
    $region3: #{tpu_custom_call.1} parent=1 // pred_check_branch
      %13 = sbr.rel (0) target = $region5
    $region4: #{tpu_custom_call.1} parent=1 // pred_region
      %s15 = ssub.s32 384, 384
      %16 = vsyncadd [#allocation3], %s15
      %s17 = sshll.u32 [#allocation2], 4
      %s18 = int_to_ptr.vmem [resolvable:$true] %s17
      %23 = dma.hbm_to_vmem [thread:$0]  %s0, 384, %s18, [#allocation3], 128, 128, 8
    $region5: #{tpu_custom_call.1} parent=1 // pred_fallthru
      _
    // Predicated region
    $region6: #{tpu_custom_call.1} parent=1 // pred_check
      _
    $region7: #{tpu_custom_call.1} parent=1 // pred_check_branch
      %25 = sbr.rel (0) target = $region9
    $region8: #{tpu_custom_call.1} parent=1 // pred_region
      %26 = dma.done [#allocation3], 384
    $region9: #{tpu_custom_call.1} parent=1 // pred_fallthru
      _
    %v27 = vld [vmem:[#allocation2] sm:$0xff]
    %v28 = vld [vmem:[#allocation2 + $0x8] sm:$0xff]
    %v29 = vld [vmem:[#allocation2 + $0x10] sm:$0xff]
    %v30 = vlaneseq
    %v31 = vshrl.u32 %v30, 7
    %v32 = vadd.s32 %v31, 8
    %v33 = vadd.s32 %v31, 16
    %vm34 = vcmp.ge.s32.totalorder %v31, 19
    %vm35 = vcmp.ge.s32.totalorder %v32, 19
    %vm36 = vcmp.ge.s32.totalorder %v33, 19
    %v37 = vcvt.s32.f32 %v31
    %v38 = vcvt.s32.f32 %v32
    %v39 = vcvt.s32.f32 %v33
    %v40 = vsel %vm34, -1e+30, %v27
    %v41 = vsel %vm35, -1e+30, %v28
    %v42 = vsel %vm36, -1e+30, %v29
    %v43 = vmax.f32 %v40, %v41
    %v44 = vmax.f32 %v43, %v42
    %v45 = vrot.slane %v44, 4
    %v46 = vmax.f32 %v44, %v45
    %v47 = vrot.slane %v46, 2
    %v48 = vmax.f32 %v46, %v47
    %v49 = vrot.slane %v48, 1
    %v50 = vmax.f32 %v48, %v49
    %vm51 = vcmp.ge.f32.partialorder %v40, %v50
    %vm52 = vcmp.ge.f32.partialorder %v41, %v50
    %vm53 = vcmp.ge.f32.partialorder %v42, %v50
    %v54 = vsel %vm51, %v37, 24.0
    %v55 = vsel %vm52, %v38, 24.0
    %v56 = vsel %vm53, %v39, 24.0
    %v57 = vmin.f32 %v54, %v55
    %v58 = vmin.f32 %v57, %v56
    %v59 = vrot.slane %v58, 4
    %v60 = vmin.f32 %v58, %v59
    %v61 = vrot.slane %v60, 2
    %v62 = vmin.f32 %v60, %v61
    %v63 = vrot.slane %v62, 1
    %v64 = vmin.f32 %v62, %v63
    %vm65 = vcmp.eq.s32.totalorder %v31, 0
    %vm66 = vcmp.eq.s32.totalorder %v32, 0
    %vm67 = vcmp.eq.s32.totalorder %v33, 0
    %v68 = vsel %vm65, -1e+30, %v40
    %v69 = vsel %vm66, -1e+30, %v41
    %v70 = vsel %vm67, -1e+30, %v42
    %v71 = vmax.f32 %v68, %v69
    %v72 = vmax.f32 %v71, %v70
    %v73 = vrot.slane %v72, 4
    %v74 = vmax.f32 %v72, %v73
    %v75 = vrot.slane %v74, 2
    %v76 = vmax.f32 %v74, %v75
    %v77 = vrot.slane %v76, 1
    %v78 = vmax.f32 %v76, %v77
    %vm79 = vcmp.ge.f32.partialorder %v68, %v78
    %vm80 = vcmp.ge.f32.partialorder %v69, %v78
    %vm81 = vcmp.ge.f32.partialorder %v70, %v78
    %v82 = vsel %vm79, %v37, 24.0
    %v83 = vsel %vm80, %v38, 24.0
    %v84 = vsel %vm81, %v39, 24.0
    %v85 = vmin.f32 %v82, %v83
    %v86 = vmin.f32 %v85, %v84
    %v87 = vrot.slane %v86, 4
    %v88 = vmin.f32 %v86, %v87
    %v89 = vrot.slane %v88, 2
    %v90 = vmin.f32 %v88, %v89
    %v91 = vrot.slane %v90, 1
    %v92 = vmin.f32 %v90, %v91
    %vm93 = vcmp.eq.s32.totalorder %v31, 4
    %vm94 = vcmp.eq.s32.totalorder %v32, 4
    %vm95 = vcmp.eq.s32.totalorder %v33, 4
    %v96 = vsel %vm93, 0.0, %v27
    %v97 = vsel %vm94, 0.0, %v28
    %v98 = vsel %vm95, 0.0, %v29
    %v99 = vsel %vm34, -1e+30, %v96
    %v100 = vsel %vm35, -1e+30, %v97
    %v101 = vsel %vm36, -1e+30, %v98
    %v102 = vmax.f32 %v99, %v100
    %v103 = vmax.f32 %v102, %v101
    %v104 = vrot.slane %v103, 4
    %v105 = vmax.f32 %v103, %v104
    %v106 = vrot.slane %v105, 2
    %v107 = vmax.f32 %v105, %v106
    %v108 = vrot.slane %v107, 1
    %v109 = vmax.f32 %v107, %v108
    %vm110 = vcmp.ge.f32.partialorder %v99, %v109
    %vm111 = vcmp.ge.f32.partialorder %v100, %v109
    %vm112 = vcmp.ge.f32.partialorder %v101, %v109
    %v113 = vsel %vm110, %v37, 24.0
    %v114 = vsel %vm111, %v38, 24.0
    %v115 = vsel %vm112, %v39, 24.0
    %v116 = vmin.f32 %v113, %v114
    %v117 = vmin.f32 %v116, %v115
    %v118 = vrot.slane %v117, 4
    %v119 = vmin.f32 %v117, %v118
    %v120 = vrot.slane %v119, 2
    %v121 = vmin.f32 %v119, %v120
    %v122 = vrot.slane %v121, 1
    %v123 = vmin.f32 %v121, %v122
    %v124 = vsel %vm65, -1e+30, %v99
    %v125 = vsel %vm66, -1e+30, %v100
    %v126 = vsel %vm67, -1e+30, %v101
    %v127 = vmax.f32 %v124, %v125
    %v128 = vmax.f32 %v127, %v126
    %v129 = vrot.slane %v128, 4
    %v130 = vmax.f32 %v128, %v129
    %v131 = vrot.slane %v130, 2
    %v132 = vmax.f32 %v130, %v131
    %v133 = vrot.slane %v132, 1
    %v134 = vmax.f32 %v132, %v133
    %vm135 = vcmp.ge.f32.partialorder %v124, %v134
    %vm136 = vcmp.ge.f32.partialorder %v125, %v134
    %vm137 = vcmp.ge.f32.partialorder %v126, %v134
    %v138 = vsel %vm135, %v37, 24.0
    %v139 = vsel %vm136, %v38, 24.0
    %v140 = vsel %vm137, %v39, 24.0
    %v141 = vmin.f32 %v138, %v139
    %v142 = vmin.f32 %v141, %v140
    %v143 = vrot.slane %v142, 4
    %v144 = vmin.f32 %v142, %v143
    %v145 = vrot.slane %v144, 2
    %v146 = vmin.f32 %v144, %v145
    %v147 = vrot.slane %v146, 1
    %v148 = vmin.f32 %v146, %v147
    %vm149 = vcmp.eq.s32.totalorder %v31, 7
    %vm150 = vcmp.eq.s32.totalorder %v32, 7
    %vm151 = vcmp.eq.s32.totalorder %v33, 7
    %v152 = vsel %vm149, 0.0, %v27
    %v153 = vsel %vm150, 0.0, %v28
    %v154 = vsel %vm151, 0.0, %v29
    %v155 = vsel %vm34, -1e+30, %v152
    %v156 = vsel %vm35, -1e+30, %v153
    %v157 = vsel %vm36, -1e+30, %v154
    %v158 = vmax.f32 %v155, %v156
    %v159 = vmax.f32 %v158, %v157
    %v160 = vrot.slane %v159, 4
    %v161 = vmax.f32 %v159, %v160
    %v162 = vrot.slane %v161, 2
    %v163 = vmax.f32 %v161, %v162
    %v164 = vrot.slane %v163, 1
    %v165 = vmax.f32 %v163, %v164
    %vm166 = vcmp.ge.f32.partialorder %v155, %v165
    %vm167 = vcmp.ge.f32.partialorder %v156, %v165
    %vm168 = vcmp.ge.f32.partialorder %v157, %v165
    %v169 = vsel %vm166, %v37, 24.0
    %v170 = vsel %vm167, %v38, 24.0
    %v171 = vsel %vm168, %v39, 24.0
    %v172 = vmin.f32 %v169, %v170
    %v173 = vmin.f32 %v172, %v171
    %v174 = vrot.slane %v173, 4
    %v175 = vmin.f32 %v173, %v174
    %v176 = vrot.slane %v175, 2
    %v177 = vmin.f32 %v175, %v176
    %v178 = vrot.slane %v177, 1
    %v179 = vmin.f32 %v177, %v178
    %v180 = vsel %vm65, -1e+30, %v155
    %v181 = vsel %vm66, -1e+30, %v156
    %v182 = vsel %vm67, -1e+30, %v157
    %v183 = vmax.f32 %v180, %v181
    %v184 = vmax.f32 %v183, %v182
    %v185 = vrot.slane %v184, 4
    %v186 = vmax.f32 %v184, %v185
    %v187 = vrot.slane %v186, 2
    %v188 = vmax.f32 %v186, %v187
    %v189 = vrot.slane %v188, 1
    %v190 = vmax.f32 %v188, %v189
    %vm191 = vcmp.ge.f32.partialorder %v180, %v190
    %vm192 = vcmp.ge.f32.partialorder %v181, %v190
    %vm193 = vcmp.ge.f32.partialorder %v182, %v190
    %v194 = vsel %vm191, %v37, 24.0
    %v195 = vsel %vm192, %v38, 24.0
    %v196 = vsel %vm193, %v39, 24.0
    %v197 = vmin.f32 %v194, %v195
    %v198 = vmin.f32 %v197, %v196
    %v199 = vrot.slane %v198, 4
    %v200 = vmin.f32 %v198, %v199
    %v201 = vrot.slane %v200, 2
    %v202 = vmin.f32 %v200, %v201
    %v203 = vrot.slane %v202, 1
    %v204 = vmin.f32 %v202, %v203
    %v205 = vsel %vm149, 0.0, %v96
    %v206 = vsel %vm150, 0.0, %v97
    %v207 = vsel %vm151, 0.0, %v98
    %v208 = vsel %vm34, -1e+30, %v205
    %v209 = vsel %vm35, -1e+30, %v206
    %v210 = vsel %vm36, -1e+30, %v207
    %v211 = vmax.f32 %v208, %v209
    %v212 = vmax.f32 %v211, %v210
    %v213 = vrot.slane %v212, 4
    %v214 = vmax.f32 %v212, %v213
    %v215 = vrot.slane %v214, 2
    %v216 = vmax.f32 %v214, %v215
    %v217 = vrot.slane %v216, 1
    %v218 = vmax.f32 %v216, %v217
    %vm219 = vcmp.ge.f32.partialorder %v208, %v218
    %vm220 = vcmp.ge.f32.partialorder %v209, %v218
    %vm221 = vcmp.ge.f32.partialorder %v210, %v218
    %v222 = vsel %vm219, %v37, 24.0
    %v223 = vsel %vm220, %v38, 24.0
    %v224 = vsel %vm221, %v39, 24.0
    %v225 = vmin.f32 %v222, %v223
    %v226 = vmin.f32 %v225, %v224
    %v227 = vrot.slane %v226, 4
    %v228 = vmin.f32 %v226, %v227
    %v229 = vrot.slane %v228, 2
    %v230 = vmin.f32 %v228, %v229
    %v231 = vrot.slane %v230, 1
    %v232 = vmin.f32 %v230, %v231
    %v233 = vsel %vm65, -1e+30, %v208
    %v234 = vsel %vm66, -1e+30, %v209
    %v235 = vsel %vm67, -1e+30, %v210
    %v236 = vmax.f32 %v233, %v234
    %v237 = vmax.f32 %v236, %v235
    %v238 = vrot.slane %v237, 4
    %v239 = vmax.f32 %v237, %v238
    %v240 = vrot.slane %v239, 2
    %v241 = vmax.f32 %v239, %v240
    %v242 = vrot.slane %v241, 1
    %v243 = vmax.f32 %v241, %v242
    %vm244 = vcmp.ge.f32.partialorder %v233, %v243
    %vm245 = vcmp.ge.f32.partialorder %v234, %v243
    %vm246 = vcmp.ge.f32.partialorder %v235, %v243
    %v247 = vsel %vm244, %v37, 24.0
    %v248 = vsel %vm245, %v38, 24.0
    %v249 = vsel %vm246, %v39, 24.0
    %v250 = vmin.f32 %v247, %v248
    %v251 = vmin.f32 %v250, %v249
    %v252 = vrot.slane %v251, 4
    %v253 = vmin.f32 %v251, %v252
    %v254 = vrot.slane %v253, 2
    %v255 = vmin.f32 %v253, %v254
    %v256 = vrot.slane %v255, 1
    %v257 = vmin.f32 %v255, %v256
    %vm258 = vcmp.eq.s32.totalorder %v31, 16
    %vm259 = vcmp.eq.s32.totalorder %v32, 16
    %vm260 = vcmp.eq.s32.totalorder %v33, 16
    %v261 = vsel %vm258, 0.0, %v27
    %v262 = vsel %vm259, 0.0, %v28
    %v263 = vsel %vm260, 0.0, %v29
    %v264 = vsel %vm34, -1e+30, %v261
    %v265 = vsel %vm35, -1e+30, %v262
    %v266 = vsel %vm36, -1e+30, %v263
    %v267 = vmax.f32 %v264, %v265
    %v268 = vmax.f32 %v267, %v266
    %v269 = vrot.slane %v268, 4
    %v270 = vmax.f32 %v268, %v269
    %v271 = vrot.slane %v270, 2
    %v272 = vmax.f32 %v270, %v271
    %v273 = vrot.slane %v272, 1
    %v274 = vmax.f32 %v272, %v273
    %vm275 = vcmp.ge.f32.partialorder %v264, %v274
    %vm276 = vcmp.ge.f32.partialorder %v265, %v274
    %vm277 = vcmp.ge.f32.partialorder %v266, %v274
    %v278 = vsel %vm275, %v37, 24.0
    %v279 = vsel %vm276, %v38, 24.0
    %v280 = vsel %vm277, %v39, 24.0
    %v281 = vmin.f32 %v278, %v279
    %v282 = vmin.f32 %v281, %v280
    %v283 = vrot.slane %v282, 4
    %v284 = vmin.f32 %v282, %v283
    %v285 = vrot.slane %v284, 2
    %v286 = vmin.f32 %v284, %v285
    %v287 = vrot.slane %v286, 1
    %v288 = vmin.f32 %v286, %v287
    %v289 = vsel %vm65, -1e+30, %v264
    %v290 = vsel %vm66, -1e+30, %v265
    %v291 = vsel %vm67, -1e+30, %v266
    %v292 = vmax.f32 %v289, %v290
    %v293 = vmax.f32 %v292, %v291
    %v294 = vrot.slane %v293, 4
    %v295 = vmax.f32 %v293, %v294
    %v296 = vrot.slane %v295, 2
    %v297 = vmax.f32 %v295, %v296
    %v298 = vrot.slane %v297, 1
    %v299 = vmax.f32 %v297, %v298
    %vm300 = vcmp.ge.f32.partialorder %v289, %v299
    %vm301 = vcmp.ge.f32.partialorder %v290, %v299
    %vm302 = vcmp.ge.f32.partialorder %v291, %v299
    %v303 = vsel %vm300, %v37, 24.0
    %v304 = vsel %vm301, %v38, 24.0
    %v305 = vsel %vm302, %v39, 24.0
    %v306 = vmin.f32 %v303, %v304
    %v307 = vmin.f32 %v306, %v305
    %v308 = vrot.slane %v307, 4
    %v309 = vmin.f32 %v307, %v308
    %v310 = vrot.slane %v309, 2
    %v311 = vmin.f32 %v309, %v310
    %v312 = vrot.slane %v311, 1
    %v313 = vmin.f32 %v311, %v312
    %v314 = vsel %vm258, 0.0, %v96
    %v315 = vsel %vm259, 0.0, %v97
    %v316 = vsel %vm260, 0.0, %v98
    %v317 = vsel %vm34, -1e+30, %v314
    %v318 = vsel %vm35, -1e+30, %v315
    %v319 = vsel %vm36, -1e+30, %v316
    %v320 = vmax.f32 %v317, %v318
    %v321 = vmax.f32 %v320, %v319
    %v322 = vrot.slane %v321, 4
    %v323 = vmax.f32 %v321, %v322
    %v324 = vrot.slane %v323, 2
    %v325 = vmax.f32 %v323, %v324
    %v326 = vrot.slane %v325, 1
    %v327 = vmax.f32 %v325, %v326
    %vm328 = vcmp.ge.f32.partialorder %v317, %v327
    %vm329 = vcmp.ge.f32.partialorder %v318, %v327
    %vm330 = vcmp.ge.f32.partialorder %v319, %v327
    %v331 = vsel %vm328, %v37, 24.0
    %v332 = vsel %vm329, %v38, 24.0
    %v333 = vsel %vm330, %v39, 24.0
    %v334 = vmin.f32 %v331, %v332
    %v335 = vmin.f32 %v334, %v333
    %v336 = vrot.slane %v335, 4
    %v337 = vmin.f32 %v335, %v336
    %v338 = vrot.slane %v337, 2
    %v339 = vmin.f32 %v337, %v338
    %v340 = vrot.slane %v339, 1
    %v341 = vmin.f32 %v339, %v340
    %v342 = vsel %vm65, -1e+30, %v317
    %v343 = vsel %vm66, -1e+30, %v318
    %v344 = vsel %vm67, -1e+30, %v319
    %v345 = vmax.f32 %v342, %v343
    %v346 = vmax.f32 %v345, %v344
    %v347 = vrot.slane %v346, 4
    %v348 = vmax.f32 %v346, %v347
    %v349 = vrot.slane %v348, 2
    %v350 = vmax.f32 %v348, %v349
    %v351 = vrot.slane %v350, 1
    %v352 = vmax.f32 %v350, %v351
    %vm353 = vcmp.ge.f32.partialorder %v342, %v352
    %vm354 = vcmp.ge.f32.partialorder %v343, %v352
    %vm355 = vcmp.ge.f32.partialorder %v344, %v352
    %v356 = vsel %vm353, %v37, 24.0
    %v357 = vsel %vm354, %v38, 24.0
    %v358 = vsel %vm355, %v39, 24.0
    %v359 = vmin.f32 %v356, %v357
    %v360 = vmin.f32 %v359, %v358
    %v361 = vrot.slane %v360, 4
    %v362 = vmin.f32 %v360, %v361
    %v363 = vrot.slane %v362, 2
    %v364 = vmin.f32 %v362, %v363
    %v365 = vrot.slane %v364, 1
    %v366 = vmin.f32 %v364, %v365
    %v367 = vsel %vm258, 0.0, %v152
    %v368 = vsel %vm259, 0.0, %v153
    %v369 = vsel %vm260, 0.0, %v154
    %v370 = vsel %vm34, -1e+30, %v367
    %v371 = vsel %vm35, -1e+30, %v368
    %v372 = vsel %vm36, -1e+30, %v369
    %v373 = vmax.f32 %v370, %v371
    %v374 = vmax.f32 %v373, %v372
    %v375 = vrot.slane %v374, 4
    %v376 = vmax.f32 %v374, %v375
    %v377 = vrot.slane %v376, 2
    %v378 = vmax.f32 %v376, %v377
    %v379 = vrot.slane %v378, 1
    %v380 = vmax.f32 %v378, %v379
    %vm381 = vcmp.ge.f32.partialorder %v370, %v380
    %vm382 = vcmp.ge.f32.partialorder %v371, %v380
    %vm383 = vcmp.ge.f32.partialorder %v372, %v380
    %v384 = vsel %vm381, %v37, 24.0
    %v385 = vsel %vm382, %v38, 24.0
    %v386 = vsel %vm383, %v39, 24.0
    %v387 = vmin.f32 %v384, %v385
    %v388 = vmin.f32 %v387, %v386
    %v389 = vrot.slane %v388, 4
    %v390 = vmin.f32 %v388, %v389
    %v391 = vrot.slane %v390, 2
    %v392 = vmin.f32 %v390, %v391
    %v393 = vrot.slane %v392, 1
    %v394 = vmin.f32 %v392, %v393
    %v395 = vsel %vm65, -1e+30, %v370
    %v396 = vsel %vm66, -1e+30, %v371
    %v397 = vsel %vm67, -1e+30, %v372
    %v398 = vmax.f32 %v395, %v396
    %v399 = vmax.f32 %v398, %v397
    %v400 = vrot.slane %v399, 4
    %v401 = vmax.f32 %v399, %v400
    %v402 = vrot.slane %v401, 2
    %v403 = vmax.f32 %v401, %v402
    %v404 = vrot.slane %v403, 1
    %v405 = vmax.f32 %v403, %v404
    %vm406 = vcmp.ge.f32.partialorder %v395, %v405
    %vm407 = vcmp.ge.f32.partialorder %v396, %v405
    %vm408 = vcmp.ge.f32.partialorder %v397, %v405
    %v409 = vsel %vm406, %v37, 24.0
    %v410 = vsel %vm407, %v38, 24.0
    %v411 = vsel %vm408, %v39, 24.0
    %v412 = vmin.f32 %v409, %v410
    %v413 = vmin.f32 %v412, %v411
    %v414 = vrot.slane %v413, 4
    %v415 = vmin.f32 %v413, %v414
    %v416 = vrot.slane %v415, 2
    %v417 = vmin.f32 %v415, %v416
    %v418 = vrot.slane %v417, 1
    %v419 = vmin.f32 %v417, %v418
    %v420 = vsel %vm258, 0.0, %v205
    %v421 = vsel %vm259, 0.0, %v206
    %v422 = vsel %vm260, 0.0, %v207
    %v423 = vsel %vm34, -1e+30, %v420
    %v424 = vsel %vm35, -1e+30, %v421
    %v425 = vsel %vm36, -1e+30, %v422
    %v426 = vmax.f32 %v423, %v424
    %v427 = vmax.f32 %v426, %v425
    %v428 = vrot.slane %v427, 4
    %v429 = vmax.f32 %v427, %v428
    %v430 = vrot.slane %v429, 2
    %v431 = vmax.f32 %v429, %v430
    %v432 = vrot.slane %v431, 1
    %v433 = vmax.f32 %v431, %v432
    %vm434 = vcmp.ge.f32.partialorder %v423, %v433
    %vm435 = vcmp.ge.f32.partialorder %v424, %v433
    %vm436 = vcmp.ge.f32.partialorder %v425, %v433
    %v437 = vsel %vm434, %v37, 24.0
    %v438 = vsel %vm435, %v38, 24.0
    %v439 = vsel %vm436, %v39, 24.0
    %v440 = vmin.f32 %v437, %v438
    %v441 = vmin.f32 %v440, %v439
    %v442 = vrot.slane %v441, 4
    %v443 = vmin.f32 %v441, %v442
    %v444 = vrot.slane %v443, 2
    %v445 = vmin.f32 %v443, %v444
    %v446 = vrot.slane %v445, 1
    %v447 = vmin.f32 %v445, %v446
    %v448 = vsel %vm65, -1e+30, %v423
    %v449 = vsel %vm66, -1e+30, %v424
    %v450 = vsel %vm67, -1e+30, %v425
    %v451 = vmax.f32 %v448, %v449
    %v452 = vmax.f32 %v451, %v450
    %v453 = vrot.slane %v452, 4
    %v454 = vmax.f32 %v452, %v453
    %v455 = vrot.slane %v454, 2
    %v456 = vmax.f32 %v454, %v455
    %v457 = vrot.slane %v456, 1
    %v458 = vmax.f32 %v456, %v457
    %vm459 = vcmp.ge.f32.partialorder %v448, %v458
    %vm460 = vcmp.ge.f32.partialorder %v449, %v458
    %vm461 = vcmp.ge.f32.partialorder %v450, %v458
    %v462 = vsel %vm459, %v37, 24.0
    %v463 = vsel %vm460, %v38, 24.0
    %v464 = vsel %vm461, %v39, 24.0
    %v465 = vmin.f32 %v462, %v463
    %v466 = vmin.f32 %v465, %v464
    %v467 = vrot.slane %v466, 4
    %v468 = vmin.f32 %v466, %v467
    %v469 = vrot.slane %v468, 2
    %v470 = vmin.f32 %v468, %v469
    %v471 = vrot.slane %v470, 1
    %v472 = vmin.f32 %v470, %v471
    %vm473 = vcmask 1040384
    %v474 = vsel %vm473, %v64, %v123
    %vm475 = vcmask 1041408
    %v476 = vsel %vm475, %v474, %v179
    %vm477 = vcmask 1042432
    %v478 = vsel %vm477, %v476, %v232
    %vm479 = vcmask 1043456
    %v480 = vsel %vm479, %v478, %v288
    %vm481 = vcmask 1044480
    %v482 = vsel %vm481, %v480, %v341
    %vm483 = vcmask 1045504
    %v484 = vsel %vm483, %v482, %v394
    %vm485 = vcmask 1046528
    %v486 = vsel %vm485, %v484, %v447
    %v487 = vcvt.f32.s32.to.zero.pseudo %v486
    %488 = vst [vmem:[#allocation5] sm:$0xff] %v487
    %v489 = vsel %vm473, %v78, %v134
    %v490 = vsel %vm475, %v489, %v190
    %v491 = vsel %vm477, %v490, %v243
    %v492 = vsel %vm479, %v491, %v299
    %v493 = vsel %vm481, %v492, %v352
    %v494 = vsel %vm483, %v493, %v405
    %v495 = vsel %vm485, %v494, %v458
    %496 = vst [vmem:[#allocation6] sm:$0xff] %v495
    %v497 = vsel %vm473, %v92, %v148
    %v498 = vsel %vm475, %v497, %v204
    %v499 = vsel %vm477, %v498, %v257
    %v500 = vsel %vm479, %v499, %v313
    %v501 = vsel %vm481, %v500, %v366
    %v502 = vsel %vm483, %v501, %v419
    %v503 = vsel %vm485, %v502, %v472
    %v504 = vcvt.f32.s32.to.zero.pseudo %v503
    %505 = vst [vmem:[#allocation8] sm:$0xff] %v504
    // Predicated region
    $region10: #{tpu_custom_call.1} parent=1 // pred_check
      _
    $region11: #{tpu_custom_call.1} parent=1 // pred_check_branch
      %507 = sbr.rel (0) target = $region13
    $region12: #{tpu_custom_call.1} parent=1 // pred_region
      %s509 = ssub.s32 128, 128
      %510 = vsyncadd [#allocation4], %s509
      %s512 = sshll.u32 [#allocation5], 4
      %s513 = int_to_ptr.vmem [resolvable:$true] %s512
      %515 = dma.vmem_to_hbm [thread:$0]  %s513, 128, %s1, [#allocation4]
    $region13: #{tpu_custom_call.1} parent=1 // pred_fallthru
      _
    // Predicated region
    $region14: #{tpu_custom_call.1} parent=1 // pred_check
      _
    $region15: #{tpu_custom_call.1} parent=1 // pred_check_branch
      %517 = sbr.rel (0) target = $region17
    $region16: #{tpu_custom_call.1} parent=1 // pred_region
      %s519 = ssub.s32 128, 128
      %520 = vsyncadd [#allocation7], %s519
      %s522 = sshll.u32 [#allocation6], 4
      %s523 = int_to_ptr.vmem [resolvable:$true] %s522
      %525 = dma.vmem_to_hbm [thread:$0]  %s523, 128, %s2, [#allocation7]
    $region17: #{tpu_custom_call.1} parent=1 // pred_fallthru
      _
    // Predicated region
    $region18: #{tpu_custom_call.1} parent=1 // pred_check
      _
    $region19: #{tpu_custom_call.1} parent=1 // pred_check_branch
      %527 = sbr.rel (0) target = $region21
    $region20: #{tpu_custom_call.1} parent=1 // pred_region
      %s529 = ssub.s32 128, 128
      %530 = vsyncadd [#allocation7], %s529
      %s532 = sshll.u32 [#allocation8], 4
      %s533 = int_to_ptr.vmem [resolvable:$true] %s532
      %535 = dma.vmem_to_hbm [thread:$0]  %s533, 128, %s3, [#allocation7]
    $region21: #{tpu_custom_call.1} parent=1 // pred_fallthru
      _
    // Predicated region
    $region22: #{tpu_custom_call.1} parent=1 // pred_check
      _
    $region23: #{tpu_custom_call.1} parent=1 // pred_check_branch
      %537 = sbr.rel (0) target = $region25
    $region24: #{tpu_custom_call.1} parent=1 // pred_region
      %538 = dma.done [#allocation4], 128
    $region25: #{tpu_custom_call.1} parent=1 // pred_fallthru
      _
    // Predicated region
    $region26: #{tpu_custom_call.1} parent=1 // pred_check
      _
    $region27: #{tpu_custom_call.1} parent=1 // pred_check_branch
      %540 = sbr.rel (0) target = $region29
    $region28: #{tpu_custom_call.1} parent=1 // pred_region
      %541 = dma.done [#allocation7], 128
    $region29: #{tpu_custom_call.1} parent=1 // pred_fallthru
      _
    // Predicated region
    $region30: #{tpu_custom_call.1} parent=1 // pred_check
      _
    $region31: #{tpu_custom_call.1} parent=1 // pred_check_branch
      %543 = sbr.rel (0) target = $region33
    $region32: #{tpu_custom_call.1} parent=1 // pred_region
      %544 = dma.done [#allocation7], 128
    $region33: #{tpu_custom_call.1} parent=1 // pred_fallthru
      _
    %545 = vsyncpa [#allocation3], 1
    %546 = vsyncpa [#allocation4], 1
    %547 = vsyncpa [#allocation7], 1

</llo_original>
